<compile_context>
chip_gen: v5e
topology: v5e:2x2
jax: 0.10.0
libtpu: 0.0.40
codegen_flags: <defaults>
</compile_context>

<pallas_src>
import functools

import jax
import jax.numpy as jnp
from jax.experimental import pallas as pl
from jax.experimental.pallas import tpu as pltpu


def _round_up(n, m):
    return ((n + m - 1) // m) * m


def _pad2d(a, rows, cols):
    pr = rows - a.shape[0]
    pc = cols - a.shape[1]
    if pr == 0 and pc == 0:
        return a
    return jnp.pad(a, ((0, pr), (0, pc)))


# -----------------------------------------------------------------------------
# Kernels
# -----------------------------------------------------------------------------
def _mlp_resident_kernel(x_ref, w1_ref, b1_ref, w2_ref, b2_ref, o_ref):
    """Weight-resident path: grid = (token tiles,), full W1/W2 blocks.

    x is already bf16; matmuls run on the MXU with f32 accumulation and the
    bias add / ReLU stay in f32.
    """
    h = jnp.dot(x_ref[...], w1_ref[...], preferred_element_type=jnp.float32)
    h = jnp.maximum(h + b1_ref[...], 0.0)          # bias + ReLU in f32
    # drop: p = 0.0 -> identity (eval semantics)
    out = jnp.dot(h.astype(jnp.bfloat16), w2_ref[...],
                  preferred_element_type=jnp.float32) + b2_ref[...]
    o_ref[...] = out.astype(o_ref.dtype)


def _mlp_tiled_kernel_f32out(x_ref, w1_ref, b1_ref, w2_ref, b2_ref, o_ref):
    """Tiled path, f32 output: accumulate fc2 partials directly into the
    resident output block (seeded with b2), no scratch / finalize copy.

    Grid = (token tiles, hidden tiles); the hidden axis is the fc2 reduction.
    """
    h_idx = pl.program_id(1)

    @pl.when(h_idx == 0)
    def _init():
        o_ref[...] = jnp.broadcast_to(b2_ref[...], o_ref.shape)

    h = jnp.dot(x_ref[...], w1_ref[...], preferred_element_type=jnp.float32)
    h = jnp.maximum(h + b1_ref[...], 0.0)
    o_ref[...] += jnp.dot(h.astype(jnp.bfloat16), w2_ref[...],
                          preferred_element_type=jnp.float32)


def _mlp_tiled_kernel_acc(x_ref, w1_ref, b1_ref, w2_ref, b2_ref, o_ref,
                          acc_ref):
    """Tiled path, non-f32 output: accumulate in a f32 VMEM scratch and cast
    on the final hidden step."""
    h_idx = pl.program_id(1)

    @pl.when(h_idx == 0)
    def _init():
        acc_ref[...] = jnp.broadcast_to(b2_ref[...], acc_ref.shape)

    h = jnp.dot(x_ref[...], w1_ref[...], preferred_element_type=jnp.float32)
    h = jnp.maximum(h + b1_ref[...], 0.0)
    acc_ref[...] += jnp.dot(h.astype(jnp.bfloat16), w2_ref[...],
                            preferred_element_type=jnp.float32)

    @pl.when(h_idx == pl.num_programs(1) - 1)
    def _finalize():
        o_ref[...] = acc_ref[...].astype(o_ref.dtype)


# -----------------------------------------------------------------------------
# Wrapper
# -----------------------------------------------------------------------------
_VMEM_LIMIT_BYTES = 48 * 1024 * 1024          # < 64 MiB v7x physical; > defaults
_RESIDENT_WEIGHT_LIMIT = 20 * 1024 * 1024     # bf16 W1+W2 budget for fast path


def _choose_token_tile(T, row_tile):
    """Token tile: multiple of 16 (bf16 sublane packing); >= 256 and a
    multiple of 256 for large inputs; kept small enough that there are >= 2
    token tiles when possible (so the 'parallel' axis can shard across the two
    v7x TensorCores)."""
    t16 = _round_up(max(T, 1), 16)
    if t16 <= 256:
        return t16
    tm = min(_round_up(row_tile, 256), _round_up(t16, 256))
    while tm > 256 and _round_up(T, tm) // tm < 2:
        tm -= 256
    return tm


def mlp_pallas(x, w1, b1, w2, b2, *, row_tile=512, hidden_tile=1024,
               resident_weight_limit=_RESIDENT_WEIGHT_LIMIT):
    """x: (T, in); w1: (in, hidden); b1: (1, hidden); w2: (hidden, out);
    b2: (1, out).  Returns (T, out) in x.dtype.

    Note: MXU operands are cast to bf16 (f32 accumulation) -- an intentional
    precision tradeoff vs an f32-exact reference.
    """
    T, Din = x.shape
    H = w1.shape[1]
    Dout = w2.shape[1]
    assert w1.shape == (Din, H) and w2.shape == (H, Dout)
    out_dtype = x.dtype

    # Lane-dense padding: feature dims up to multiples of 128 (zero padding is
    # exact: padded x cols / W rows are zero; padded outputs are sliced off).
    din_p = _round_up(Din, 128)
    h_p = _round_up(H, 128)
    dout_p = _round_up(Dout, 128)

    tm = _choose_token_tile(T, row_tile)
    t_p = _round_up(T, tm)
    num_token_tiles = t_p // tm

    # Pre-cast x (and weights) to bf16 in the wrapper: halves x HBM->VMEM DMA
    # and removes the in-kernel per-step cast.
    xp = _pad2d(x, t_p, din_p).astype(jnp.bfloat16)
    w1p = _pad2d(w1, din_p, h_p).astype(jnp.bfloat16)
    w2p = _pad2d(w2, h_p, dout_p).astype(jnp.bfloat16)
    b1p = _pad2d(b1.reshape(1, -1), 1, h_p).astype(jnp.float32)
    b2p = _pad2d(b2.reshape(1, -1), 1, dout_p).astype(jnp.float32)

    flops = 2 * t_p * din_p * h_p + 2 * t_p * h_p * dout_p
    x_bytes = xp.size * 2
    w_bytes = (w1p.size + w2p.size) * 2
    b_bytes = (b1p.size + b2p.size) * 4
    out_bytes = t_p * dout_p * jnp.dtype(out_dtype).itemsize

    weight_bytes_bf16 = (din_p * h_p + h_p * dout_p) * 2
    weight_resident = weight_bytes_bf16 <= resident_weight_limit

    compiler_params = pltpu.CompilerParams(
        dimension_semantics=("parallel",) if weight_resident
        else ("parallel", "arbitrary"),
        vmem_limit_bytes=_VMEM_LIMIT_BYTES,
    )

    if weight_resident:
        # Fast path: weights loaded once, no hidden grid axis, no accumulator.
        grid = (num_token_tiles,)
        bytes_accessed = x_bytes + w_bytes + b_bytes + out_bytes
        out_p = pl.pallas_call(
            _mlp_resident_kernel,
            out_shape=jax.ShapeDtypeStruct((t_p, dout_p), out_dtype),
            grid_spec=pltpu.PrefetchScalarGridSpec(
                num_scalar_prefetch=0,
                grid=grid,
                in_specs=[
                    pl.BlockSpec((tm, din_p), lambda i: (i, 0)),      # x tile
                    pl.BlockSpec((din_p, h_p), lambda i: (0, 0)),     # W1 (full)
                    pl.BlockSpec((1, h_p), lambda i: (0, 0)),         # b1
                    pl.BlockSpec((h_p, dout_p), lambda i: (0, 0)),    # W2 (full)
                    pl.BlockSpec((1, dout_p), lambda i: (0, 0)),      # b2
                ],
                out_specs=pl.BlockSpec((tm, dout_p), lambda i: (i, 0)),
            ),
            compiler_params=compiler_params,
            cost_estimate=pl.CostEstimate(
                flops=flops, transcendentals=0, bytes_accessed=bytes_accessed),
        )(xp, w1p, b1p, w2p, b2p)
        return out_p[:T, :Dout]

    # Tiled fallback: hidden (reduction) axis tiled so full W1/W2 never have
    # to be resident at once.
    th = min(_round_up(hidden_tile, 128), h_p)
    while h_p % th != 0:
        th -= 128
    grid = (num_token_tiles, h_p // th)
    # Weights (and b1) are re-streamed once per token tile in this path.
    bytes_accessed = (x_bytes + (w_bytes + b_bytes) * num_token_tiles
                      + out_bytes)

    in_specs = [
        pl.BlockSpec((tm, din_p), lambda i, h: (i, 0)),     # x tile
        pl.BlockSpec((din_p, th), lambda i, h: (0, h)),     # W1 col tile
        pl.BlockSpec((1, th), lambda i, h: (0, h)),         # b1 tile
        pl.BlockSpec((th, dout_p), lambda i, h: (h, 0)),    # W2 row tile
        pl.BlockSpec((1, dout_p), lambda i, h: (0, 0)),     # b2
    ]
    out_spec = pl.BlockSpec((tm, dout_p), lambda i, h: (i, 0))

    if jnp.dtype(out_dtype) == jnp.float32:
        kernel = _mlp_tiled_kernel_f32out
        scratch_shapes = []
    else:
        kernel = _mlp_tiled_kernel_acc
        scratch_shapes = [pltpu.VMEM((tm, dout_p), jnp.float32)]

    out_p = pl.pallas_call(
        kernel,
        out_shape=jax.ShapeDtypeStruct((t_p, dout_p), out_dtype),
        grid_spec=pltpu.PrefetchScalarGridSpec(
            num_scalar_prefetch=0,
            grid=grid,
            in_specs=in_specs,
            out_specs=out_spec,
            scratch_shapes=scratch_shapes,
        ),
        compiler_params=compiler_params,
        cost_estimate=pl.CostEstimate(
            flops=flops, transcendentals=0, bytes_accessed=bytes_accessed),
    )(xp, w1p, b1p, w2p, b2p)

    return out_p[:T, :Dout]


# -----------------------------------------------------------------------------
# Parameter init mirroring the PyTorch module
# -----------------------------------------------------------------------------
def init_mlp_params(key, in_features, hidden_features, out_features,
                    dtype=jnp.float32):
    """Mirror Mlp.model_init: Linear weights ~ N(0, 0.01), biases = 0.
    PyTorch Linear stores weight as (out, in); we keep the transposed
    (in, out) layout used by the kernel (y = x @ W^T + b)."""
    k1, k2 = jax.random.split(key)
    w1_pt = 0.01 * jax.random.normal(k1, (hidden_features, in_features), dtype)
    w2_pt = 0.01 * jax.random.normal(k2, (out_features, hidden_features), dtype)
    w1 = w1_pt.T                                   # (in, hidden)
    b1 = jnp.zeros((1, hidden_features), dtype)
    w2 = w2_pt.T                                   # (hidden, out)
    b2 = jnp.zeros((1, out_features), dtype)
    return w1, b1, w2, b2


if __name__ == "__main__":
    key = jax.random.PRNGKey(0)
    kx, kp, kx2, kp2 = jax.random.split(key, 4)

    # Small ViT-style shapes: batch=2, seq=8, in=32, hidden=64, out=32.
    # Weights easily fit VMEM -> weight-resident fast path.
    B, N, Din, H, Dout = 2, 8, 32, 64, 32
    x = jax.random.normal(kx, (B, N, Din), jnp.float32)
    w1, b1, w2, b2 = init_mlp_params(kp, Din, H, Dout)

    x2d = x.reshape(B * N, Din)
    out2d = mlp_pallas(x2d, w1, b1, w2, b2)
    out = out2d.reshape(B, N, Dout)
    jax.block_until_ready(out)

    # Reference in plain JAX (same math as PyTorch forward, drop=0).
    ref = jnp.maximum(x2d @ w1 + b1, 0.0) @ w2 + b2
    assert jnp.allclose(out2d, ref, atol=2e-3, rtol=2e-2), float(
        jnp.max(jnp.abs(out2d - ref)))

    # Second check: force the tiled fallback (resident_weight_limit=0) with a
    # multi-step grid (2 token tiles x 2 hidden tiles) to validate the
    # init/accumulate path that writes partials directly into the f32 output.
    T2, Din2, H2, Dout2 = 512, 128, 256, 128
    x2 = jax.random.normal(kx2, (T2, Din2), jnp.float32)
    w1b, b1b, w2b, b2b = init_mlp_params(kp2, Din2, H2, Dout2)
    out2 = mlp_pallas(x2, w1b, b1b, w2b, b2b, row_tile=256, hidden_tile=128,
                      resident_weight_limit=0)
    jax.block_until_ready(out2)
    ref2 = jnp.maximum(x2 @ w1b + b1b, 0.0) @ w2b + b2b
    assert jnp.allclose(out2, ref2, atol=2e-3, rtol=2e-2), float(
        jnp.max(jnp.abs(out2 - ref2)))

    # Third check: bf16 output exercises the scratch-accumulator tiled kernel.
    out3 = mlp_pallas(x2.astype(jnp.bfloat16), w1b, b1b, w2b, b2b,
                      row_tile=256, hidden_tile=128, resident_weight_limit=0)
    jax.block_until_ready(out3)
    assert jnp.allclose(out3.astype(jnp.float32), ref2, atol=1e-2, rtol=5e-2), \
        float(jnp.max(jnp.abs(out3.astype(jnp.float32) - ref2)))

    # TODO(synk): dropout with p > 0 (training mode) would need pltpu.prng_*;
    # module default drop=0.0 is an identity so it is omitted here.
    print("KERNEL_OK")
</pallas_src>

<mosaic_0001>
module attributes {stable_mosaic.version = 11 : i64} {
  func.func @_mlp_resident_kernel(%arg0: i32, %arg1: memref<16x128xbf16, #tpu.memory_space<vmem>>, %arg2: memref<128x128xbf16, #tpu.memory_space<vmem>>, %arg3: memref<1x128xf32, #tpu.memory_space<vmem>>, %arg4: memref<128x128xbf16, #tpu.memory_space<vmem>>, %arg5: memref<1x128xf32, #tpu.memory_space<vmem>>, %arg6: memref<16x128xf32, #tpu.memory_space<vmem>>) attributes {dimension_semantics = [#tpu.dimension_semantics<parallel>], iteration_bounds = array<i64: 1>, scalar_prefetch = 0 : i64, scratch_operands = 0 : i64, tpu.core_type = #tpu.core_type<tc>, window_params = [{transform_indices = @transform_0, window_bounds = array<i64: 16, 128>}, {pipeline_mode = #tpu.pipeline_mode<synchronous>, transform_indices = @transform_1, window_bounds = array<i64: 128, 128>}, {pipeline_mode = #tpu.pipeline_mode<synchronous>, transform_indices = @transform_2, window_bounds = array<i64: 1, 128>}, {pipeline_mode = #tpu.pipeline_mode<synchronous>, transform_indices = @transform_3, window_bounds = array<i64: 128, 128>}, {pipeline_mode = #tpu.pipeline_mode<synchronous>, transform_indices = @transform_4, window_bounds = array<i64: 1, 128>}, {transform_indices = @transform_5, window_bounds = array<i64: 16, 128>}]} {
    %c0 = arith.constant 0 : index
    %c0_0 = arith.constant 0 : index
    %0 = vector.load %arg1[%c0, %c0_0] : memref<16x128xbf16, #tpu.memory_space<vmem>>, vector<16x128xbf16>
    %c0_1 = arith.constant 0 : index
    %c0_2 = arith.constant 0 : index
    %1 = vector.load %arg2[%c0_1, %c0_2] : memref<128x128xbf16, #tpu.memory_space<vmem>>, vector<128x128xbf16>
    %cst = arith.constant dense<0.000000e+00> : vector<16x128xf32>
    %2 = tpu.matmul %0, %1, %cst {dimension_numbers = #tpu.dot_dimension_numbers<[1], [0], [0], [1], [0, 0, 1, 1], [], []>} : vector<16x128xbf16>, vector<128x128xbf16>, vector<16x128xf32> -> vector<16x128xf32>
    %c0_3 = arith.constant 0 : index
    %c0_4 = arith.constant 0 : index
    %3 = vector.load %arg3[%c0_3, %c0_4] : memref<1x128xf32, #tpu.memory_space<vmem>>, vector<1x128xf32>
    %4 = vector.broadcast %3 : vector<1x128xf32> to vector<16x128xf32>
    %5 = arith.addf %2, %4 : vector<16x128xf32>
    %cst_5 = arith.constant 0.000000e+00 : f32
    %6 = vector.broadcast %cst_5 : f32 to vector<16x128xf32>
    %7 = arith.maximumf %5, %6 : vector<16x128xf32>
    %8 = arith.truncf %7 : vector<16x128xf32> to vector<16x128xbf16>
    %c0_6 = arith.constant 0 : index
    %c0_7 = arith.constant 0 : index
    %9 = vector.load %arg4[%c0_6, %c0_7] : memref<128x128xbf16, #tpu.memory_space<vmem>>, vector<128x128xbf16>
    %cst_8 = arith.constant dense<0.000000e+00> : vector<16x128xf32>
    %10 = tpu.matmul %8, %9, %cst_8 {dimension_numbers = #tpu.dot_dimension_numbers<[1], [0], [0], [1], [0, 0, 1, 1], [], []>} : vector<16x128xbf16>, vector<128x128xbf16>, vector<16x128xf32> -> vector<16x128xf32>
    %c0_9 = arith.constant 0 : index
    %c0_10 = arith.constant 0 : index
    %11 = vector.load %arg5[%c0_9, %c0_10] : memref<1x128xf32, #tpu.memory_space<vmem>>, vector<1x128xf32>
    %12 = vector.broadcast %11 : vector<1x128xf32> to vector<16x128xf32>
    %13 = arith.addf %10, %12 : vector<16x128xf32>
    %c0_11 = arith.constant 0 : index
    %c0_12 = arith.constant 0 : index
    %14 = vector.load %arg6[%c0_11, %c0_12] : memref<16x128xf32, #tpu.memory_space<vmem>>, vector<16x128xf32>
    tpu.vector_store %arg6[%c0_11, %c0_12], %13 {strides = array<i32>} : memref<16x128xf32, #tpu.memory_space<vmem>>, vector<16x128xf32>,
    return
  }
  func.func @transform_0(%arg0: i32) -> (i32, i32) {
    %c0_i32 = arith.constant 0 : i32
    %c0_i32_0 = arith.constant 0 : i32
    return %arg0, %c0_i32 : i32, i32
  }
  func.func @transform_1(%arg0: i32) -> (i32, i32) {
    %c0_i32 = arith.constant 0 : i32
    %c0_i32_0 = arith.constant 0 : i32
    %c0_i32_1 = arith.constant 0 : i32
    return %c0_i32, %c0_i32_0 : i32, i32
  }
  func.func @transform_2(%arg0: i32) -> (i32, i32) {
    %c0_i32 = arith.constant 0 : i32
    %c0_i32_0 = arith.constant 0 : i32
    %c0_i32_1 = arith.constant 0 : i32
    return %c0_i32, %c0_i32_0 : i32, i32
  }
  func.func @transform_3(%arg0: i32) -> (i32, i32) {
    %c0_i32 = arith.constant 0 : i32
    %c0_i32_0 = arith.constant 0 : i32
    %c0_i32_1 = arith.constant 0 : i32
    return %c0_i32, %c0_i32_0 : i32, i32
  }
  func.func @transform_4(%arg0: i32) -> (i32, i32) {
    %c0_i32 = arith.constant 0 : i32
    %c0_i32_0 = arith.constant 0 : i32
    %c0_i32_1 = arith.constant 0 : i32
    return %c0_i32, %c0_i32_0 : i32, i32
  }
  func.func @transform_5(%arg0: i32) -> (i32, i32) {
    %c0_i32 = arith.constant 0 : i32
    %c0_i32_0 = arith.constant 0 : i32
    return %arg0, %c0_i32 : i32, i32
  }
}

</mosaic_0001>

<llo_original>
// kernel: tpu_custom_call.1
$region0: #{tpu_custom_call.1}
  #allocation0 [shape = 'u32[]', space=smem, size = 0x4, offset = 0x4, fixed_abs, tag = 'smem constant byte address 0x4 - core index']
  #allocation1 [shape = 'u32[72,128]{1,0:T(1,128)}', space=vmem, size = 0x9000, scoped, tag = 'internal scratch']
  %s0 = inlined_call_operand.hbm [shape: bf16[16,128], index: 0, kind: input, shape index: {}]
  %s1 = inlined_call_operand.hbm [shape: bf16[128,128], index: 1, kind: input, shape index: {}]
  %s2 = inlined_call_operand.vmem [shape: f32[1,128], index: 2, kind: input, shape index: {}]
  %s3 = inlined_call_operand.hbm [shape: bf16[128,128], index: 3, kind: input, shape index: {}]
  %s4 = inlined_call_operand.vmem [shape: f32[1,128], index: 4, kind: input, shape index: {}]
  %s5 = inlined_call_operand.hbm [shape: f32[16,128], index: 5, kind: output, shape index: {}]
  %s6 = sld [smem:[#allocation0]]
  $region42: #{tpu_custom_call.1} parent=0
    _
  %s8 = ssub.s32 1, %s6
  %s9 = scalar_select 0, %s8, %s6
  $region1: #{tpu_custom_call.1} parent=0
    #allocation2 [shape = 'u8[4096]{0}', space=vmem, size = 0x1000, scoped, tag = 'input window, operand 0, single buffered']
    #allocation3 [shape = 's32[1]{0}', space=sflag, size = 0x4, scoped, tag = 'scoped memory for tpu_custom_call.1']
    #allocation4 [shape = 's32[1]{0}', space=sflag, size = 0x4, scoped, tag = 'scoped memory for tpu_custom_call.1']
    #allocation5 [shape = 'u8[32768]{0}', space=vmem, size = 0x8000, scoped, tag = 'input window, operand 1, single buffered']
    #allocation6 [shape = 's32[1]{0}', space=sflag, size = 0x4, scoped, tag = 'scoped memory for tpu_custom_call.1']
    #allocation7 [shape = 'u8[32768]{0}', space=vmem, size = 0x8000, scoped, tag = 'input window, operand 3, single buffered']
    #allocation8 [shape = 'u8[8192]{0}', space=vmem, size = 0x2000, scoped, tag = 'output window, operand 0, single buffered']
    %10 = vsyncpa [#allocation3], 0
    %11 = vsyncpa [#allocation6], 0
    %12 = vsyncpa [#allocation4], 0
    // Predicated region
    $region2: #{tpu_custom_call.1} parent=1 // pred_check
      _
    $region3: #{tpu_custom_call.1} parent=1 // pred_check_branch
      %14 = sbr.rel (0) target = $region5
    $region4: #{tpu_custom_call.1} parent=1 // pred_region
      %16 = vsyncadd [#allocation3], 0
      %s17 = sshll.u32 %s0, 4
      %s18 = int_to_ptr.hbm [resolvable:$true] %s17
      %s19 = sshll.u32 [#allocation2], 4
      %s20 = int_to_ptr.vmem [resolvable:$true] %s19
      %25 = dma.hbm_to_vmem [thread:$0]  %s18, 128, %s20, [#allocation3], 64, 64, 4
    $region5: #{tpu_custom_call.1} parent=1 // pred_fallthru
      _
    // Predicated region
    $region6: #{tpu_custom_call.1} parent=1 // pred_check
      _
    $region7: #{tpu_custom_call.1} parent=1 // pred_check_branch
      %27 = sbr.rel (0) target = $region9
    $region8: #{tpu_custom_call.1} parent=1 // pred_region
      %29 = vsyncadd [#allocation6], 0
      %s30 = sshll.u32 %s1, 4
      %s31 = int_to_ptr.hbm [resolvable:$true] %s30
      %s32 = sshll.u32 [#allocation5], 4
      %s33 = int_to_ptr.vmem [resolvable:$true] %s32
      %38 = dma.hbm_to_vmem [thread:$0]  %s31, 1024, %s33, [#allocation6], 64, 64, 4
    $region9: #{tpu_custom_call.1} parent=1 // pred_fallthru
      _
    // Predicated region
    $region10: #{tpu_custom_call.1} parent=1 // pred_check
      _
    $region11: #{tpu_custom_call.1} parent=1 // pred_check_branch
      %40 = sbr.rel (0) target = $region13
    $region12: #{tpu_custom_call.1} parent=1 // pred_region
      _
    $region13: #{tpu_custom_call.1} parent=1 // pred_fallthru
      _
    // Predicated region
    $region14: #{tpu_custom_call.1} parent=1 // pred_check
      _
    $region15: #{tpu_custom_call.1} parent=1 // pred_check_branch
      %42 = sbr.rel (0) target = $region17
    $region16: #{tpu_custom_call.1} parent=1 // pred_region
      %44 = vsyncadd [#allocation6], 0
      %s45 = sshll.u32 %s3, 4
      %s46 = int_to_ptr.hbm [resolvable:$true] %s45
      %s47 = sshll.u32 [#allocation7], 4
      %s48 = int_to_ptr.vmem [resolvable:$true] %s47
      %53 = dma.hbm_to_vmem [thread:$0]  %s46, 1024, %s48, [#allocation6], 64, 64, 4
    $region17: #{tpu_custom_call.1} parent=1 // pred_fallthru
      _
    // Predicated region
    $region18: #{tpu_custom_call.1} parent=1 // pred_check
      _
    $region19: #{tpu_custom_call.1} parent=1 // pred_check_branch
      %55 = sbr.rel (0) target = $region21
    $region20: #{tpu_custom_call.1} parent=1 // pred_region
      _
    $region21: #{tpu_custom_call.1} parent=1 // pred_fallthru
      _
    // Predicated region
    $region22: #{tpu_custom_call.1} parent=1 // pred_check
      _
    $region23: #{tpu_custom_call.1} parent=1 // pred_check_branch
      %57 = sbr.rel (0) target = $region25
    $region24: #{tpu_custom_call.1} parent=1 // pred_region
      %59 = dma.done [#allocation3], 128
    $region25: #{tpu_custom_call.1} parent=1 // pred_fallthru
      _
    // Predicated region
    $region26: #{tpu_custom_call.1} parent=1 // pred_check
      _
    $region27: #{tpu_custom_call.1} parent=1 // pred_check_branch
      %61 = sbr.rel (0) target = $region29
    $region28: #{tpu_custom_call.1} parent=1 // pred_region
      %63 = dma.done [#allocation6], 1024
    $region29: #{tpu_custom_call.1} parent=1 // pred_fallthru
      _
    // Predicated region
    $region30: #{tpu_custom_call.1} parent=1 // pred_check
      _
    $region31: #{tpu_custom_call.1} parent=1 // pred_check_branch
      %65 = sbr.rel (0) target = $region33
    $region32: #{tpu_custom_call.1} parent=1 // pred_region
      %67 = dma.done [#allocation6], 1024
    $region33: #{tpu_custom_call.1} parent=1 // pred_fallthru
      _
    %v68 = vld [vmem:[#allocation2] sm:$0xf]
    %v69 = vld [vmem:[#allocation2 + $0x4] sm:$0xf]
    %v70 = vld [vmem:[#allocation5] sm:$0xf]
    %v71 = vld [vmem:[#allocation5 + $0x4] sm:$0xf]
    %v72 = vld [vmem:[#allocation5 + $0x8] sm:$0xf]
    %v73 = vld [vmem:[#allocation5 + $0xc] sm:$0xf]
    %v74 = vld [vmem:[#allocation5 + $0x10] sm:$0xf]
    %v75 = vld [vmem:[#allocation5 + $0x14] sm:$0xf]
    %v76 = vld [vmem:[#allocation5 + $0x18] sm:$0xf]
    %v77 = vld [vmem:[#allocation5 + $0x1c] sm:$0xf]
    %v78 = vld [vmem:[#allocation5 + $0x20] sm:$0xf]
    %v79 = vld [vmem:[#allocation5 + $0x24] sm:$0xf]
    %v80 = vld [vmem:[#allocation5 + $0x28] sm:$0xf]
    %v81 = vld [vmem:[#allocation5 + $0x2c] sm:$0xf]
    %v82 = vld [vmem:[#allocation5 + $0x30] sm:$0xf]
    %v83 = vld [vmem:[#allocation5 + $0x34] sm:$0xf]
    %v84 = vld [vmem:[#allocation5 + $0x38] sm:$0xf]
    %v85 = vld [vmem:[#allocation5 + $0x3c] sm:$0xf]
    %v86 = vld [vmem:[%s2] sm:$0x1]
    %v88 = vperm.slane %v86, 0
    %v92 = vunpack.c.l.b16 %v68
    %v93 = vunpack.c.l.b16 %v69
    %v94 = vpack.c.b16 %v93, %v92
    %v112 = vunpack.c.l.b16 %v70
    %v113 = vunpack.c.l.b16 %v71
    %v114 = vunpack.c.l.b16 %v72
    %v115 = vunpack.c.l.b16 %v73
    %v116 = vunpack.c.l.b16 %v74
    %v117 = vunpack.c.l.b16 %v75
    %v118 = vunpack.c.l.b16 %v76
    %v119 = vunpack.c.l.b16 %v77
    %v120 = vunpack.c.l.b16 %v78
    %v121 = vunpack.c.l.b16 %v79
    %v122 = vunpack.c.l.b16 %v80
    %v123 = vunpack.c.l.b16 %v81
    %v124 = vunpack.c.l.b16 %v82
    %v125 = vunpack.c.l.b16 %v83
    %v126 = vunpack.c.l.b16 %v84
    %v127 = vunpack.c.l.b16 %v85
    %v128 = vpack.c.b16 %v113, %v112
    %v129 = vpack.c.b16 %v115, %v114
    %v130 = vpack.c.b16 %v117, %v116
    %v131 = vpack.c.b16 %v119, %v118
    %v132 = vpack.c.b16 %v121, %v120
    %v133 = vpack.c.b16 %v123, %v122
    %v134 = vpack.c.b16 %v125, %v124
    %v135 = vpack.c.b16 %v127, %v126
    %144 = vmatpush.bf16.msra.mxu0 %v135
    %145 = vmatpush.bf16.msra.mxu0 %v134
    %146 = vmatpush.bf16.msra.mxu0 %v133
    %147 = vmatpush.bf16.msra.mxu0 %v132
    %148 = vmatpush.bf16.msra.mxu0 %v131
    %149 = vmatpush.bf16.msra.mxu0 %v130
    %150 = vmatpush.bf16.msra.mxu0 %v129
    %151 = vmatpush.bf16.msra.mxu0 %v128
    %152 = vmatmul.bf16.gmra.mxu0 %v94
    %v153 = vpop.f32.mrf.mxu0
    %v154 = vadd.f32 %v88, %v153
    %v155 = vpop.f32.mrf.mxu0
    %v156 = vadd.f32 %v88, %v155
    %157 = vdwg.mxu0
    %v158 = vmax.f32 %v154, 0.0
    %v159 = vmax.f32 %v156, 0.0
    %v160 = vpack.c.bf16 %v159, %v158
    %v161 = vld [vmem:[#allocation7] sm:$0xf]
    %v162 = vld [vmem:[#allocation7 + $0x4] sm:$0xf]
    %v163 = vld [vmem:[#allocation7 + $0x8] sm:$0xf]
    %v164 = vld [vmem:[#allocation7 + $0xc] sm:$0xf]
    %v165 = vld [vmem:[#allocation7 + $0x10] sm:$0xf]
    %v166 = vld [vmem:[#allocation7 + $0x14] sm:$0xf]
    %v167 = vld [vmem:[#allocation7 + $0x18] sm:$0xf]
    %v168 = vld [vmem:[#allocation7 + $0x1c] sm:$0xf]
    %v169 = vld [vmem:[#allocation7 + $0x20] sm:$0xf]
    %v170 = vld [vmem:[#allocation7 + $0x24] sm:$0xf]
    %v171 = vld [vmem:[#allocation7 + $0x28] sm:$0xf]
    %v172 = vld [vmem:[#allocation7 + $0x2c] sm:$0xf]
    %v173 = vld [vmem:[#allocation7 + $0x30] sm:$0xf]
    %v174 = vld [vmem:[#allocation7 + $0x34] sm:$0xf]
    %v175 = vld [vmem:[#allocation7 + $0x38] sm:$0xf]
    %v176 = vld [vmem:[#allocation7 + $0x3c] sm:$0xf]
    %v177 = vld [vmem:[%s4] sm:$0x1]
    %v179 = vperm.slane %v177, 0
    %v197 = vunpack.c.l.b16 %v161
    %v198 = vunpack.c.l.b16 %v162
    %v199 = vunpack.c.l.b16 %v163
    %v200 = vunpack.c.l.b16 %v164
    %v201 = vunpack.c.l.b16 %v165
    %v202 = vunpack.c.l.b16 %v166
    %v203 = vunpack.c.l.b16 %v167
    %v204 = vunpack.c.l.b16 %v168
    %v205 = vunpack.c.l.b16 %v169
    %v206 = vunpack.c.l.b16 %v170
    %v207 = vunpack.c.l.b16 %v171
    %v208 = vunpack.c.l.b16 %v172
    %v209 = vunpack.c.l.b16 %v173
    %v210 = vunpack.c.l.b16 %v174
    %v211 = vunpack.c.l.b16 %v175
    %v212 = vunpack.c.l.b16 %v176
    %v213 = vpack.c.b16 %v198, %v197
    %v214 = vpack.c.b16 %v200, %v199
    %v215 = vpack.c.b16 %v202, %v201
    %v216 = vpack.c.b16 %v204, %v203
    %v217 = vpack.c.b16 %v206, %v205
    %v218 = vpack.c.b16 %v208, %v207
    %v219 = vpack.c.b16 %v210, %v209
    %v220 = vpack.c.b16 %v212, %v211
    %229 = vmatpush.bf16.msra.mxu0 %v220
    %230 = vmatpush.bf16.msra.mxu0 %v219
    %231 = vmatpush.bf16.msra.mxu0 %v218
    %232 = vmatpush.bf16.msra.mxu0 %v217
    %233 = vmatpush.bf16.msra.mxu0 %v216
    %234 = vmatpush.bf16.msra.mxu0 %v215
    %235 = vmatpush.bf16.msra.mxu0 %v214
    %236 = vmatpush.bf16.msra.mxu0 %v213
    %237 = vmatmul.bf16.gmra.mxu0 %v160
    %v238 = vpop.f32.mrf.mxu0
    %v239 = vadd.f32 %v179, %v238
    %v240 = vpop.f32.mrf.mxu0
    %v241 = vadd.f32 %v179, %v240
    %242 = vdwg.mxu0
    %243 = vst [vmem:[#allocation8] sm:$0xff] %v239
    %244 = vst [vmem:[#allocation8 + $0x8] sm:$0xff] %v241
    // Predicated region
    $region34: #{tpu_custom_call.1} parent=1 // pred_check
      _
    $region35: #{tpu_custom_call.1} parent=1 // pred_check_branch
      %246 = sbr.rel (0) target = $region37
    $region36: #{tpu_custom_call.1} parent=1 // pred_region
      %248 = vsyncadd [#allocation4], 0
      %s249 = sshll.u32 [#allocation8], 4
      %s250 = int_to_ptr.vmem [resolvable:$true] %s249
      %s251 = sshll.u32 %s5, 4
      %s252 = int_to_ptr.hbm [resolvable:$true] %s251
      %257 = dma.vmem_to_hbm [thread:$0]  %s250, 256, %s252, [#allocation4], 128, 128, 8
    $region37: #{tpu_custom_call.1} parent=1 // pred_fallthru
      _
    // Predicated region
    $region38: #{tpu_custom_call.1} parent=1 // pred_check
      _
    $region39: #{tpu_custom_call.1} parent=1 // pred_check_branch
      %259 = sbr.rel (0) target = $region41
    $region40: #{tpu_custom_call.1} parent=1 // pred_region
      %261 = dma.done [#allocation4], 256
    $region41: #{tpu_custom_call.1} parent=1 // pred_fallthru
      _
    %262 = vsyncpa [#allocation3], 1
    %263 = vsyncpa [#allocation6], 1
    %264 = vsyncpa [#allocation4], 1

</llo_original>
